<compile_context>
chip_gen: v7x
topology: tpu7x:2x2x1
jax: 0.10.0
libtpu: 0.0.40
codegen_flags: <defaults>
</compile_context>

<pallas_src>
import functools
import math

import jax
import jax.numpy as jnp
from jax.experimental import pallas as pl
from jax.experimental.pallas import tpu as pltpu


# -----------------------------------------------------------------------------
# Buffer construction (mirrors PositionalEncoding.__init__)
# -----------------------------------------------------------------------------
def make_positional_encoding(d_model: int, max_len: int = 5000) -> jnp.ndarray:
    """Deterministic sinusoidal PE buffer, shape (max_len, 1, d_model), float32."""
    position = jnp.arange(0, max_len, dtype=jnp.float32)[:, None]            # (L, 1)
    div_term = jnp.exp(
        jnp.arange(0, d_model, 2, dtype=jnp.float32)
        * (-math.log(10000.0) / d_model)
    )                                                                          # (D/2,)
    pe = jnp.zeros((max_len, d_model), dtype=jnp.float32)
    pe = pe.at[:, 0::2].set(jnp.sin(position * div_term))
    pe = pe.at[:, 1::2].set(jnp.cos(position * div_term))
    return pe[:, None, :]  # unsqueeze(0).transpose(0, 1) -> (max_len, 1, d_model)


# -----------------------------------------------------------------------------
# Kernel bodies (pure VPU elementwise add; PE broadcast happens in VMEM)
# -----------------------------------------------------------------------------
def _pe_add_bcast_kernel(x_ref, pe_ref, o_ref):
    # x: (tS, B, D), pe: (tS, D) -> broadcast PE over the batch (sublane) axis.
    o_ref[...] = x_ref[...] + pe_ref[...][:, None, :]


def _pe_add_flat_kernel(x_ref, pe_ref, o_ref, *, batch):
    # x: (tS, B*D), pe: (tS, D) -> replicate PE across the batch inside VMEM.
    pe_t = pe_ref[...]
    pe_wide = pe_t if batch == 1 else jnp.tile(pe_t, (1, batch))
    o_ref[...] = x_ref[...] + pe_wide


# -----------------------------------------------------------------------------
# Generation-aware tiling helpers
# -----------------------------------------------------------------------------
def _vmem_capacity_bytes() -> int:
    """Physical VMEM per TensorCore; conservative (v7x) fallback if unknown."""
    try:
        info = pltpu.get_tpu_info()
        cap = getattr(info, "vmem_capacity_bytes", None)
        if cap:
            return int(cap)
    except Exception:
        pass
    return 64 * 1024 * 1024


def _sublane_multiple(dtype) -> int:
    # f32 -> 8, bf16 -> 16, int8/fp8 -> 32 rows per packed sublane tile.
    return max(8, 32 // jnp.dtype(dtype).itemsize)


def _effective_row_bytes(B: int, D: int, x_itemsize: int, out_itemsize: int) -> int:
    """Honest per-seq-row VMEM footprint: double-buffered x/out/pe + kernel temps."""
    pipelined = B * D * (x_itemsize + out_itemsize) + D * 4   # x + out + pe rows
    scratch = B * D * 4                                        # broadcast/tile temp (f32)
    if x_itemsize < 4:
        scratch += B * D * 4                                   # promoted-x temp
    return 2 * pipelined + scratch


def _pick_seq_tile(S: int, effective_row_bytes: int, sub: int, tile_budget: int) -> int:
    """Largest sublane-aligned sequence tile fitting the VMEM budget, >=2 grid steps."""
    max_rows = max(sub, tile_budget // max(1, effective_row_bytes))
    tS = min(S, max_rows)
    if tS < S:
        tS = max(sub, (tS // sub) * sub)          # keep the sublane dim aligned
    elif S >= 2 * sub:
        # Whole sequence fits in one tile: split so both v7x TCs get work and
        # the DMA/compute pipeline has >=2 steps (harmless on v5e/v6e).
        tS = max(sub, ((S // 2) // sub) * sub)
    return tS


# -----------------------------------------------------------------------------
# Forward wrapper
# -----------------------------------------------------------------------------
def positional_encoding_forward(x: jnp.ndarray, pe: jnp.ndarray) -> jnp.ndarray:
    """forward(x) = x + pe[:x.shape[0], :]  with x of shape (S, B, D)."""
    S, B, D = x.shape

    # PE stays f32 (like the PyTorch buffer); the add promotes, matching torch.
    pe = jnp.asarray(pe, dtype=jnp.float32)
    if pe.ndim == 3:
        pe = pe[:, 0, :]
    pe_s = pe[:S]                                              # (S, D) f32
    out_dtype = jnp.result_type(x.dtype, jnp.float32)

    xi = jnp.dtype(x.dtype).itemsize
    oi = jnp.dtype(out_dtype).itemsize
    sub = _sublane_multiple(x.dtype)

    # Generation-aware VMEM budget (v7x: 48/32 MiB; v5e/v6e: 112/96 MiB).
    cap = _vmem_capacity_bytes()
    vmem_limit = max(32 << 20, cap - (16 << 20))
    tile_budget = max(16 << 20, vmem_limit - (16 << 20))

    row_bytes = _effective_row_bytes(B, D, xi, oi)
    tS = _pick_seq_tile(S, row_bytes, sub, tile_budget)
    grid = (pl.cdiv(S, tS),)

    compiler_params = pltpu.CompilerParams(
        dimension_semantics=("parallel",),       # shard S across TCs on v7x
        vmem_limit_bytes=vmem_limit,
    )
    cost = pl.CostEstimate(
        flops=S * B * D,
        transcendentals=0,
        bytes_accessed=S * B * D * (xi + oi) + S * D * 4,
    )

    if D % 128 == 0 and B % sub == 0:
        # Native 3-D layout: lanes and sublanes already dense; PE read once (1/B
        # of the x traffic) and broadcast across the batch inside VMEM.
        return pl.pallas_call(
            _pe_add_bcast_kernel,
            out_shape=jax.ShapeDtypeStruct((S, B, D), out_dtype),
            grid=grid,
            in_specs=[
                pl.BlockSpec((tS, B, D), lambda i: (i, 0, 0)),
                pl.BlockSpec((tS, D), lambda i: (i, 0)),
            ],
            out_specs=pl.BlockSpec((tS, B, D), lambda i: (i, 0, 0)),
            compiler_params=compiler_params,
            cost_estimate=cost,
        )(x, pe_s)

    # Lane-dense fallback for small / unpacked batch or D not a multiple of 128:
    # flatten to (S, B*D) so stores are as lane-dense as the shape allows; PE is
    # still only (S, D) in HBM and replicated across the batch inside the kernel.
    x2 = x.reshape(S, B * D)
    out2 = pl.pallas_call(
        functools.partial(_pe_add_flat_kernel, batch=B),
        out_shape=jax.ShapeDtypeStruct((S, B * D), out_dtype),
        grid=grid,
        in_specs=[
            pl.BlockSpec((tS, B * D), lambda i: (i, 0)),
            pl.BlockSpec((tS, D), lambda i: (i, 0)),
        ],
        out_specs=pl.BlockSpec((tS, B * D), lambda i: (i, 0)),
        compiler_params=compiler_params,
        cost_estimate=cost,
    )(x2, pe_s)
    return out2.reshape(S, B, D)


# -----------------------------------------------------------------------------
# Module-like wrapper: precomputes the PE buffer once and caches per-S slices
# so the slice/cast is not re-emitted ahead of every (bandwidth-bound) call.
# -----------------------------------------------------------------------------
class PositionalEncoding:
    def __init__(self, d_model: int, max_len: int = 5000):
        self.d_model = d_model
        self.pe = make_positional_encoding(d_model, max_len)[:, 0, :]  # (L, D) f32
        self._slices = {}

    def __call__(self, x: jnp.ndarray) -> jnp.ndarray:
        S = x.shape[0]
        pe_s = self._slices.get(S)
        if pe_s is None:
            pe_s = self.pe[:S]
            self._slices[S] = pe_s
        return positional_encoding_forward(x, pe_s)


# -----------------------------------------------------------------------------
# Demo / self-check
# -----------------------------------------------------------------------------
if __name__ == "__main__":
    key = jax.random.PRNGKey(0)
    k0, k1 = jax.random.split(key)

    # Small, module-consistent shape (exercises the lane-dense fallback path).
    d_model, max_len, seq_len, batch = 32, 64, 8, 2
    module = PositionalEncoding(d_model, max_len)
    x = jax.random.normal(k0, (seq_len, batch, d_model), dtype=jnp.float32)

    out = jax.block_until_ready(module(x))
    pe3d = make_positional_encoding(d_model, max_len)
    ref = x + pe3d[:seq_len]
    assert out.shape == ref.shape and out.dtype == ref.dtype
    assert jnp.allclose(out, ref, atol=1e-6, rtol=1e-6)

    # Lane/sublane-aligned shape (exercises the 3-D broadcast path, >=2 grid steps).
    d_model2, seq_len2, batch2 = 128, 32, 8
    pe2 = make_positional_encoding(d_model2, 64)
    x2 = jax.random.normal(k1, (seq_len2, batch2, d_model2), dtype=jnp.float32)

    out2 = jax.block_until_ready(positional_encoding_forward(x2, pe2))
    ref2 = x2 + pe2[:seq_len2]
    assert out2.shape == ref2.shape
    assert jnp.allclose(out2, ref2, atol=1e-6, rtol=1e-6)

    print("KERNEL_OK")
</pallas_src>

<mosaic_0001>
module attributes {stable_mosaic.version = 11 : i64} {
  func.func @_pe_add_flat_kernel(%arg0: i32, %arg1: memref<8x64xf32, #tpu.memory_space<vmem>>, %arg2: memref<8x32xf32, #tpu.memory_space<vmem>>, %arg3: memref<8x64xf32, #tpu.memory_space<vmem>>) attributes {dimension_semantics = [#tpu.dimension_semantics<parallel>], iteration_bounds = array<i64: 1>, scalar_prefetch = 0 : i64, scratch_operands = 0 : i64, tpu.core_type = #tpu.core_type<tc>, window_params = [{transform_indices = @transform_0, window_bounds = array<i64: 8, 64>}, {transform_indices = @transform_1, window_bounds = array<i64: 8, 32>}, {transform_indices = @transform_2, window_bounds = array<i64: 8, 64>}]} {
    %c0 = arith.constant 0 : index
    %c0_0 = arith.constant 0 : index
    %0 = vector.load %arg2[%c0, %c0_0] : memref<8x32xf32, #tpu.memory_space<vmem>>, vector<8x32xf32>
    %1 = tpu.concatenate %0, %0 in 1 : vector<8x32xf32>, vector<8x32xf32> -> vector<8x64xf32>
    %c0_1 = arith.constant 0 : index
    %c0_2 = arith.constant 0 : index
    %2 = vector.load %arg1[%c0_1, %c0_2] : memref<8x64xf32, #tpu.memory_space<vmem>>, vector<8x64xf32>
    %3 = arith.addf %2, %1 : vector<8x64xf32>
    %c0_3 = arith.constant 0 : index
    %c0_4 = arith.constant 0 : index
    %4 = vector.load %arg3[%c0_3, %c0_4] : memref<8x64xf32, #tpu.memory_space<vmem>>, vector<8x64xf32>
    tpu.vector_store %arg3[%c0_3, %c0_4], %3 {strides = array<i32>} : memref<8x64xf32, #tpu.memory_space<vmem>>, vector<8x64xf32>,
    return
  }
  func.func @transform_0(%arg0: i32) -> (i32, i32) {
    %c0_i32 = arith.constant 0 : i32
    %c0_i32_0 = arith.constant 0 : i32
    return %arg0, %c0_i32 : i32, i32
  }
  func.func @transform_1(%arg0: i32) -> (i32, i32) {
    %c0_i32 = arith.constant 0 : i32
    %c0_i32_0 = arith.constant 0 : i32
    return %arg0, %c0_i32 : i32, i32
  }
  func.func @transform_2(%arg0: i32) -> (i32, i32) {
    %c0_i32 = arith.constant 0 : i32
    %c0_i32_0 = arith.constant 0 : i32
    return %arg0, %c0_i32 : i32, i32
  }
}

</mosaic_0001>

<llo_original>
// kernel: tpu_custom_call.1
$region0: #{tpu_custom_call.1}
  #allocation0 [shape = 'u32[]', space=smem, size = 0x4, offset = 0x4, fixed_abs, tag = 'smem constant byte address 0x4 - core index']
  #allocation1 [shape = 'u32[144,128]{1,0:T(1,128)}', space=vmem, size = 0x12000, scoped, tag = 'internal scratch']
  %s0 = inlined_call_operand.hbm [shape: f32[8,64], index: 0, kind: input, shape index: {}]
  %s1 = inlined_call_operand.hbm [shape: f32[8,32], index: 1, kind: input, shape index: {}]
  %s2 = inlined_call_operand.hbm [shape: f32[8,64], index: 2, kind: output, shape index: {}]
  %s3 = sld [smem:[#allocation0]]
  $region26: #{tpu_custom_call.1} parent=0
    _
  %s5 = ssub.s32 1, %s3
  %s6 = scalar_select 0, %s5, %s3
  $region1: #{tpu_custom_call.1} parent=0
    #allocation2 [shape = 'u8[4096]{0}', space=vmem, size = 0x1000, scoped, tag = 'input window, operand 0, single buffered']
    #allocation3 [shape = 's32[1]{0}', space=sflag, size = 0x4, scoped, tag = 'scoped memory for tpu_custom_call.1']
    #allocation4 [shape = 's32[1]{0}', space=sflag, size = 0x4, scoped, tag = 'scoped memory for tpu_custom_call.1']
    #allocation5 [shape = 'u8[4096]{0}', space=vmem, size = 0x1000, scoped, tag = 'input window, operand 1, single buffered']
    #allocation6 [shape = 's32[1]{0}', space=sflag, size = 0x4, scoped, tag = 'scoped memory for tpu_custom_call.1']
    #allocation7 [shape = 'u8[4096]{0}', space=vmem, size = 0x1000, scoped, tag = 'output window, operand 0, single buffered']
    %7 = vsyncpa [#allocation3], 0
    %8 = vsyncpa [#allocation6], 0
    %9 = vsyncpa [#allocation4], 0
    // Predicated region
    $region2: #{tpu_custom_call.1} parent=1 // pred_check
      _
    $region3: #{tpu_custom_call.1} parent=1 // pred_check_branch
      %11 = sbr.rel (0) target = $region5
    $region4: #{tpu_custom_call.1} parent=1 // pred_region
      %s13 = ssub.s32 128, 128
      %14 = vsyncadd [#allocation3], %s13
      %s16 = sshll.u32 [#allocation2], 4
      %s17 = int_to_ptr.vmem [resolvable:$true] %s16
      %19 = dma.hbm_to_vmem [thread:$0]  %s0, 128, %s17, [#allocation3]
    $region5: #{tpu_custom_call.1} parent=1 // pred_fallthru
      _
    // Predicated region
    $region6: #{tpu_custom_call.1} parent=1 // pred_check
      _
    $region7: #{tpu_custom_call.1} parent=1 // pred_check_branch
      %21 = sbr.rel (0) target = $region9
    $region8: #{tpu_custom_call.1} parent=1 // pred_region
      %s23 = ssub.s32 128, 128
      %24 = vsyncadd [#allocation6], %s23
      %s26 = sshll.u32 [#allocation5], 4
      %s27 = int_to_ptr.vmem [resolvable:$true] %s26
      %29 = dma.hbm_to_vmem [thread:$0]  %s1, 128, %s27, [#allocation6]
    $region9: #{tpu_custom_call.1} parent=1 // pred_fallthru
      _
    // Predicated region
    $region10: #{tpu_custom_call.1} parent=1 // pred_check
      _
    $region11: #{tpu_custom_call.1} parent=1 // pred_check_branch
      %31 = sbr.rel (0) target = $region13
    $region12: #{tpu_custom_call.1} parent=1 // pred_region
      %32 = dma.done [#allocation3], 128
    $region13: #{tpu_custom_call.1} parent=1 // pred_fallthru
      _
    // Predicated region
    $region14: #{tpu_custom_call.1} parent=1 // pred_check
      _
    $region15: #{tpu_custom_call.1} parent=1 // pred_check_branch
      %34 = sbr.rel (0) target = $region17
    $region16: #{tpu_custom_call.1} parent=1 // pred_region
      %35 = dma.done [#allocation6], 128
    $region17: #{tpu_custom_call.1} parent=1 // pred_fallthru
      _
    %v36 = vld [vmem:[#allocation5] sm:$0xff]
    %38 = vrot.lane.b32.xlu0 %v36, 32
    %v39 = vpop.permute.xlu0 %38
    %vm41 = vcmask 261120
    %v42 = vsel %vm41, %v36, %v39
    %v43 = vld [vmem:[#allocation2] sm:$0xff]
    %v44 = vadd.f32 %v43, %v42
    %vm45 = vcmask 523264
    %46 = vst.msk [vmem:[#allocation7] sm:$0xff] %vm45, %v44
    // Predicated region
    $region18: #{tpu_custom_call.1} parent=1 // pred_check
      _
    $region19: #{tpu_custom_call.1} parent=1 // pred_check_branch
      %48 = sbr.rel (0) target = $region21
    $region20: #{tpu_custom_call.1} parent=1 // pred_region
      %s50 = ssub.s32 128, 128
      %51 = vsyncadd [#allocation4], %s50
      %s53 = sshll.u32 [#allocation7], 4
      %s54 = int_to_ptr.vmem [resolvable:$true] %s53
      %56 = dma.vmem_to_hbm [thread:$0]  %s54, 128, %s2, [#allocation4]
    $region21: #{tpu_custom_call.1} parent=1 // pred_fallthru
      _
    // Predicated region
    $region22: #{tpu_custom_call.1} parent=1 // pred_check
      _
    $region23: #{tpu_custom_call.1} parent=1 // pred_check_branch
      %58 = sbr.rel (0) target = $region25
    $region24: #{tpu_custom_call.1} parent=1 // pred_region
      %59 = dma.done [#allocation4], 128
    $region25: #{tpu_custom_call.1} parent=1 // pred_fallthru
      _
    %60 = vsyncpa [#allocation3], 1
    %61 = vsyncpa [#allocation6], 1
    %62 = vsyncpa [#allocation4], 1

</llo_original>
